<compile_context>
chip_gen: v7x
topology: tpu7x:2x2x1
jax: 0.10.0
libtpu: 0.0.40
codegen_flags: <defaults>
</compile_context>

<pallas_src>
import jax
import jax.numpy as jnp
from jax.experimental import pallas as pl
from jax.experimental.pallas import tpu as pltpu

_LANE = 128
_SUBLANE = 8
_MIN_ROWS_PER_STEP = 128  # don't split the batch across grid steps below this


def _round_up(x, m):
    return (x + m - 1) // m * m


def _cdiv(a, b):
    return (a + b - 1) // b


def _mlp_kernel(x_ref, w1_ref, b1_ref, w2_ref, b2_ref, o_ref):
    # fc1: (tb, Din) @ (Din, Hp) + (1, Hp) -> relu (hidden never leaves VMEM)
    h = jnp.dot(x_ref[...], w1_ref[...], preferred_element_type=jnp.float32)
    h = jnp.maximum(h + b1_ref[...], 0.0)
    # fc2: (tb, Hp) @ (Hp, Doutp) + (1, Doutp)  -- lane-dense 128-wide store
    o_ref[...] = (
        jnp.dot(h, w2_ref[...], preferred_element_type=jnp.float32) + b2_ref[...]
    )


def pad_params(w1, b1, w2, b2):
    """Lane-pad weights/biases ONCE, outside the per-call hot path.

    Zero padding of the hidden (contraction) and output dims is exact.
    The input dim (200) is intentionally NOT padded: the kernel uses a
    full-extent K block, so no HBM-side padding copy of x is ever needed.
    """
    d_in, d_hidden = w1.shape
    d_out = w2.shape[1]
    d_hid_p = _round_up(d_hidden, _LANE)   # 128 -> 128 (no-op here)
    d_out_p = _round_up(d_out, _LANE)      # 97  -> 128

    w1_p = jnp.zeros((d_in, d_hid_p), jnp.float32).at[:, :d_hidden].set(w1)
    b1_p = jnp.zeros((1, d_hid_p), jnp.float32).at[0, :d_hidden].set(b1)
    w2_p = jnp.zeros((d_hid_p, d_out_p), jnp.float32).at[:d_hidden, :d_out].set(w2)
    b2_p = jnp.zeros((1, d_out_p), jnp.float32).at[0, :d_out].set(b2)
    return w1_p, b1_p, w2_p, b2_p


def _choose_tile_b(B, batch_tile):
    # Robustness: clamp the user tile to a sublane multiple ((8,128) block rule).
    batch_tile = max(_SUBLANE, (int(batch_tile) // _SUBLANE) * _SUBLANE)
    steps = _cdiv(B, batch_tile)
    # v7x megacore: prefer >=2 (even) grid steps once each step has enough rows,
    # so the "parallel" batch axis actually shards across both TensorCores.
    if steps == 1 and B >= 2 * _MIN_ROWS_PER_STEP:
        steps = 2
    if steps > 1 and steps % 2:
        steps += 1
    return min(_round_up(_cdiv(B, steps), _SUBLANE), batch_tile)


def simple_mlp_forward(x, w1_p, b1_p, w2_p, b2_p, out_dim, *, batch_tile=1024):
    """Fused MLP forward: relu(x @ w1 + b1) @ w2 + b2.

    Args:
      x:     (B, input_dim) float32, unpadded.
      w1_p:  (input_dim, hid_p)   lane-padded fc1 weight (torch fc1.weight.T).
      b1_p:  (1, hid_p)
      w2_p:  (hid_p, out_p)       lane-padded fc2 weight (torch fc2.weight.T).
      b2_p:  (1, out_p)
      out_dim: true output dim (e.g. 97); result is sliced back to this width.
    Returns:
      (B, out_dim) float32.
    """
    B, d_in = x.shape
    d_hid_p = w1_p.shape[1]
    d_out_p = w2_p.shape[1]

    tile_b = _choose_tile_b(B, batch_tile)
    grid = (_cdiv(B, tile_b),)  # ragged last block -> Pallas masks the store

    flops = 2 * B * (d_in * d_hid_p + d_hid_p * d_out_p)
    bytes_accessed = 4 * (
        B * d_in + B * d_out_p
        + d_in * d_hid_p + d_hid_p * d_out_p + d_hid_p + d_out_p
    )

    out_p = pl.pallas_call(
        _mlp_kernel,
        out_shape=jax.ShapeDtypeStruct((B, d_out_p), jnp.float32),
        grid=grid,
        in_specs=[
            # x streams; last block dim == full array dim (200) -> legal, no pad.
            pl.BlockSpec((tile_b, d_in), lambda i: (i, 0)),
            pl.BlockSpec((d_in, d_hid_p), lambda i: (0, 0)),     # w1 resident
            pl.BlockSpec((1, d_hid_p), lambda i: (0, 0)),        # b1 resident
            pl.BlockSpec((d_hid_p, d_out_p), lambda i: (0, 0)),  # w2 resident
            pl.BlockSpec((1, d_out_p), lambda i: (0, 0)),        # b2 resident
        ],
        out_specs=pl.BlockSpec((tile_b, d_out_p), lambda i: (i, 0)),
        compiler_params=pltpu.CompilerParams(
            # Batch axis is independent across steps -> parallel (2 TCs on v7x).
            dimension_semantics=("parallel",),
        ),
        cost_estimate=pl.CostEstimate(
            flops=flops, transcendentals=0, bytes_accessed=bytes_accessed),
    )(x, w1_p, b1_p, w2_p, b2_p)

    # Only the lane padding (97 -> 128) is sliced off; the batch dim is exact.
    return out_p[:, :out_dim]


def init_params(key, input_dim=200, hidden_dim=128, output_dim=97):
    """Deterministic init mimicking torch.nn.Linear (uniform +-1/sqrt(fan_in))."""
    k1, k2, k3, k4 = jax.random.split(key, 4)
    bound1 = 1.0 / jnp.sqrt(input_dim)
    bound2 = 1.0 / jnp.sqrt(hidden_dim)
    # Stored pre-transposed: (in_features, out_features) == torch weight.T
    w1 = jax.random.uniform(k1, (input_dim, hidden_dim), jnp.float32,
                            minval=-bound1, maxval=bound1)
    b1 = jax.random.uniform(k2, (hidden_dim,), jnp.float32,
                            minval=-bound1, maxval=bound1)
    w2 = jax.random.uniform(k3, (hidden_dim, output_dim), jnp.float32,
                            minval=-bound2, maxval=bound2)
    b2 = jax.random.uniform(k4, (output_dim,), jnp.float32,
                            minval=-bound2, maxval=bound2)
    return w1, b1, w2, b2


if __name__ == "__main__":
    key = jax.random.PRNGKey(0)
    k_params, k_x = jax.random.split(key)

    input_dim, hidden_dim, output_dim = 200, 128, 97
    batch = 8

    w1, b1, w2, b2 = init_params(k_params, input_dim, hidden_dim, output_dim)
    padded = pad_params(w1, b1, w2, b2)  # once, outside the per-call path

    x = jax.random.normal(k_x, (batch, input_dim), jnp.float32)
    out = jax.block_until_ready(simple_mlp_forward(x, *padded, output_dim))

    # Pure-JAX reference check of forward semantics.
    ref = jnp.maximum(x @ w1 + b1, 0.0) @ w2 + b2
    assert out.shape == (batch, output_dim)
    assert jnp.allclose(out, ref, atol=1e-5, rtol=1e-5)

    # Exercise the multi-step ragged path (2 grid steps -> both TCs on v7x,
    # partial last block masked on store).
    big_b = 300
    x_big = jax.random.normal(jax.random.PRNGKey(1), (big_b, input_dim), jnp.float32)
    out_big = jax.block_until_ready(
        simple_mlp_forward(x_big, *padded, output_dim, batch_tile=1024))
    ref_big = jnp.maximum(x_big @ w1 + b1, 0.0) @ w2 + b2
    assert out_big.shape == (big_b, output_dim)
    assert jnp.allclose(out_big, ref_big, atol=1e-5, rtol=1e-5)

    print("KERNEL_OK")
</pallas_src>

<mosaic_0001>
module attributes {stable_mosaic.version = 11 : i64} {
  func.func @_mlp_kernel(%arg0: i32, %arg1: memref<8x200xf32, #tpu.memory_space<vmem>>, %arg2: memref<200x128xf32, #tpu.memory_space<vmem>>, %arg3: memref<1x128xf32, #tpu.memory_space<vmem>>, %arg4: memref<128x128xf32, #tpu.memory_space<vmem>>, %arg5: memref<1x128xf32, #tpu.memory_space<vmem>>, %arg6: memref<8x128xf32, #tpu.memory_space<vmem>>) attributes {dimension_semantics = [#tpu.dimension_semantics<parallel>], iteration_bounds = array<i64: 1>, scalar_prefetch = 0 : i64, scratch_operands = 0 : i64, tpu.core_type = #tpu.core_type<tc>, window_params = [{transform_indices = @transform_0, window_bounds = array<i64: 8, 200>}, {pipeline_mode = #tpu.pipeline_mode<synchronous>, transform_indices = @transform_1, window_bounds = array<i64: 200, 128>}, {pipeline_mode = #tpu.pipeline_mode<synchronous>, transform_indices = @transform_2, window_bounds = array<i64: 1, 128>}, {pipeline_mode = #tpu.pipeline_mode<synchronous>, transform_indices = @transform_3, window_bounds = array<i64: 128, 128>}, {pipeline_mode = #tpu.pipeline_mode<synchronous>, transform_indices = @transform_4, window_bounds = array<i64: 1, 128>}, {transform_indices = @transform_5, window_bounds = array<i64: 8, 128>}]} {
    %c0 = arith.constant 0 : index
    %c0_0 = arith.constant 0 : index
    %0 = vector.load %arg1[%c0, %c0_0] : memref<8x200xf32, #tpu.memory_space<vmem>>, vector<8x200xf32>
    %c0_1 = arith.constant 0 : index
    %c0_2 = arith.constant 0 : index
    %1 = vector.load %arg2[%c0_1, %c0_2] : memref<200x128xf32, #tpu.memory_space<vmem>>, vector<200x128xf32>
    %cst = arith.constant dense<0.000000e+00> : vector<8x128xf32>
    %2 = tpu.matmul %0, %1, %cst {dimension_numbers = #tpu.dot_dimension_numbers<[1], [0], [0], [1], [0, 0, 1, 1], [], []>} : vector<8x200xf32>, vector<200x128xf32>, vector<8x128xf32> -> vector<8x128xf32>
    %c0_3 = arith.constant 0 : index
    %c0_4 = arith.constant 0 : index
    %3 = vector.load %arg3[%c0_3, %c0_4] : memref<1x128xf32, #tpu.memory_space<vmem>>, vector<1x128xf32>
    %4 = vector.broadcast %3 : vector<1x128xf32> to vector<8x128xf32>
    %5 = arith.addf %2, %4 : vector<8x128xf32>
    %cst_5 = arith.constant 0.000000e+00 : f32
    %6 = vector.broadcast %cst_5 : f32 to vector<8x128xf32>
    %7 = arith.maximumf %5, %6 : vector<8x128xf32>
    %c0_6 = arith.constant 0 : index
    %c0_7 = arith.constant 0 : index
    %8 = vector.load %arg4[%c0_6, %c0_7] : memref<128x128xf32, #tpu.memory_space<vmem>>, vector<128x128xf32>
    %cst_8 = arith.constant dense<0.000000e+00> : vector<8x128xf32>
    %9 = tpu.matmul %7, %8, %cst_8 {dimension_numbers = #tpu.dot_dimension_numbers<[1], [0], [0], [1], [0, 0, 1, 1], [], []>} : vector<8x128xf32>, vector<128x128xf32>, vector<8x128xf32> -> vector<8x128xf32>
    %c0_9 = arith.constant 0 : index
    %c0_10 = arith.constant 0 : index
    %10 = vector.load %arg5[%c0_9, %c0_10] : memref<1x128xf32, #tpu.memory_space<vmem>>, vector<1x128xf32>
    %11 = vector.broadcast %10 : vector<1x128xf32> to vector<8x128xf32>
    %12 = arith.addf %9, %11 : vector<8x128xf32>
    %c0_11 = arith.constant 0 : index
    %c0_12 = arith.constant 0 : index
    %13 = vector.load %arg6[%c0_11, %c0_12] : memref<8x128xf32, #tpu.memory_space<vmem>>, vector<8x128xf32>
    tpu.vector_store %arg6[%c0_11, %c0_12], %12 {strides = array<i32>} : memref<8x128xf32, #tpu.memory_space<vmem>>, vector<8x128xf32>,
    return
  }
  func.func @transform_0(%arg0: i32) -> (i32, i32) {
    %c0_i32 = arith.constant 0 : i32
    %c0_i32_0 = arith.constant 0 : i32
    return %arg0, %c0_i32 : i32, i32
  }
  func.func @transform_1(%arg0: i32) -> (i32, i32) {
    %c0_i32 = arith.constant 0 : i32
    %c0_i32_0 = arith.constant 0 : i32
    %c0_i32_1 = arith.constant 0 : i32
    return %c0_i32, %c0_i32_0 : i32, i32
  }
  func.func @transform_2(%arg0: i32) -> (i32, i32) {
    %c0_i32 = arith.constant 0 : i32
    %c0_i32_0 = arith.constant 0 : i32
    %c0_i32_1 = arith.constant 0 : i32
    return %c0_i32, %c0_i32_0 : i32, i32
  }
  func.func @transform_3(%arg0: i32) -> (i32, i32) {
    %c0_i32 = arith.constant 0 : i32
    %c0_i32_0 = arith.constant 0 : i32
    %c0_i32_1 = arith.constant 0 : i32
    return %c0_i32, %c0_i32_0 : i32, i32
  }
  func.func @transform_4(%arg0: i32) -> (i32, i32) {
    %c0_i32 = arith.constant 0 : i32
    %c0_i32_0 = arith.constant 0 : i32
    %c0_i32_1 = arith.constant 0 : i32
    return %c0_i32, %c0_i32_0 : i32, i32
  }
  func.func @transform_5(%arg0: i32) -> (i32, i32) {
    %c0_i32 = arith.constant 0 : i32
    %c0_i32_0 = arith.constant 0 : i32
    return %arg0, %c0_i32 : i32, i32
  }
}

</mosaic_0001>

<llo_original>
// kernel: tpu_custom_call.1
$region0: #{tpu_custom_call.1}
  #allocation0 [shape = 'u32[]', space=smem, size = 0x4, offset = 0x4, fixed_abs, tag = 'smem constant byte address 0x4 - core index']
  #allocation1 [shape = 'u32[144,128]{1,0:T(1,128)}', space=vmem, size = 0x12000, scoped, tag = 'internal scratch']
  %s0 = inlined_call_operand.hbm [shape: f32[8,200], index: 0, kind: input, shape index: {}]
  %s1 = inlined_call_operand.hbm [shape: f32[200,128], index: 1, kind: input, shape index: {}]
  %s2 = inlined_call_operand.vmem [shape: f32[1,128], index: 2, kind: input, shape index: {}]
  %s3 = inlined_call_operand.hbm [shape: f32[128,128], index: 3, kind: input, shape index: {}]
  %s4 = inlined_call_operand.vmem [shape: f32[1,128], index: 4, kind: input, shape index: {}]
  %s5 = inlined_call_operand.hbm [shape: f32[8,128], index: 5, kind: output, shape index: {}]
  %s6 = sld [smem:[#allocation0]]
  $region42: #{tpu_custom_call.1} parent=0
    _
  %s8 = ssub.s32 1, %s6
  %s9 = scalar_select 0, %s8, %s6
  $region1: #{tpu_custom_call.1} parent=0
    #allocation2 [shape = 'u8[8192]{0}', space=vmem, size = 0x2000, scoped, tag = 'input window, operand 0, single buffered']
    #allocation3 [shape = 's32[1]{0}', space=sflag, size = 0x4, scoped, tag = 'scoped memory for tpu_custom_call.1']
    #allocation4 [shape = 's32[1]{0}', space=sflag, size = 0x4, scoped, tag = 'scoped memory for tpu_custom_call.1']
    #allocation5 [shape = 'u8[102400]{0}', space=vmem, size = 0x19000, scoped, tag = 'input window, operand 1, single buffered']
    #allocation6 [shape = 's32[1]{0}', space=sflag, size = 0x4, scoped, tag = 'scoped memory for tpu_custom_call.1']
    #allocation7 [shape = 'u8[65536]{0}', space=vmem, size = 0x10000, scoped, tag = 'input window, operand 3, single buffered']
    #allocation8 [shape = 'u8[4096]{0}', space=vmem, size = 0x1000, scoped, tag = 'output window, operand 0, single buffered']
    %10 = vsyncpa [#allocation3], 0
    %11 = vsyncpa [#allocation6], 0
    %12 = vsyncpa [#allocation4], 0
    // Predicated region
    $region2: #{tpu_custom_call.1} parent=1 // pred_check
      _
    $region3: #{tpu_custom_call.1} parent=1 // pred_check_branch
      %14 = sbr.rel (0) target = $region5
    $region4: #{tpu_custom_call.1} parent=1 // pred_region
      %s16 = ssub.s32 256, 256
      %17 = vsyncadd [#allocation3], %s16
      %s19 = sshll.u32 [#allocation2], 4
      %s20 = int_to_ptr.vmem [resolvable:$true] %s19
      %22 = dma.hbm_to_vmem [thread:$0]  %s0, 256, %s20, [#allocation3]
    $region5: #{tpu_custom_call.1} parent=1 // pred_fallthru
      _
    // Predicated region
    $region6: #{tpu_custom_call.1} parent=1 // pred_check
      _
    $region7: #{tpu_custom_call.1} parent=1 // pred_check_branch
      %24 = sbr.rel (0) target = $region9
    $region8: #{tpu_custom_call.1} parent=1 // pred_region
      %s26 = ssub.s32 3200, 3200
      %27 = vsyncadd [#allocation6], %s26
      %s28 = sshll.u32 [#allocation5], 4
      %s29 = int_to_ptr.vmem [resolvable:$true] %s28
      %34 = dma.hbm_to_vmem [thread:$0]  %s1, 3200, %s29, [#allocation6], 128, 128, 8
    $region9: #{tpu_custom_call.1} parent=1 // pred_fallthru
      _
    // Predicated region
    $region10: #{tpu_custom_call.1} parent=1 // pred_check
      _
    $region11: #{tpu_custom_call.1} parent=1 // pred_check_branch
      %36 = sbr.rel (0) target = $region13
    $region12: #{tpu_custom_call.1} parent=1 // pred_region
      _
    $region13: #{tpu_custom_call.1} parent=1 // pred_fallthru
      _
    // Predicated region
    $region14: #{tpu_custom_call.1} parent=1 // pred_check
      _
    $region15: #{tpu_custom_call.1} parent=1 // pred_check_branch
      %38 = sbr.rel (0) target = $region17
    $region16: #{tpu_custom_call.1} parent=1 // pred_region
      %s40 = ssub.s32 2048, 2048
      %41 = vsyncadd [#allocation6], %s40
      %s42 = sshll.u32 [#allocation7], 4
      %s43 = int_to_ptr.vmem [resolvable:$true] %s42
      %48 = dma.hbm_to_vmem [thread:$0]  %s3, 2048, %s43, [#allocation6], 128, 128, 8
    $region17: #{tpu_custom_call.1} parent=1 // pred_fallthru
      _
    // Predicated region
    $region18: #{tpu_custom_call.1} parent=1 // pred_check
      _
    $region19: #{tpu_custom_call.1} parent=1 // pred_check_branch
      %50 = sbr.rel (0) target = $region21
    $region20: #{tpu_custom_call.1} parent=1 // pred_region
      _
    $region21: #{tpu_custom_call.1} parent=1 // pred_fallthru
      _
    // Predicated region
    $region22: #{tpu_custom_call.1} parent=1 // pred_check
      _
    $region23: #{tpu_custom_call.1} parent=1 // pred_check_branch
      %52 = sbr.rel (0) target = $region25
    $region24: #{tpu_custom_call.1} parent=1 // pred_region
      %53 = dma.done [#allocation3], 256
    $region25: #{tpu_custom_call.1} parent=1 // pred_fallthru
      _
    // Predicated region
    $region26: #{tpu_custom_call.1} parent=1 // pred_check
      _
    $region27: #{tpu_custom_call.1} parent=1 // pred_check_branch
      %55 = sbr.rel (0) target = $region29
    $region28: #{tpu_custom_call.1} parent=1 // pred_region
      %56 = dma.done [#allocation6], 3200
    $region29: #{tpu_custom_call.1} parent=1 // pred_fallthru
      _
    // Predicated region
    $region30: #{tpu_custom_call.1} parent=1 // pred_check
      _
    $region31: #{tpu_custom_call.1} parent=1 // pred_check_branch
      %58 = sbr.rel (0) target = $region33
    $region32: #{tpu_custom_call.1} parent=1 // pred_region
      %59 = dma.done [#allocation6], 2048
    $region33: #{tpu_custom_call.1} parent=1 // pred_fallthru
      _
    %v60 = vld [vmem:[#allocation2] sm:$0xff]
    %v61 = vld [vmem:[#allocation2 + $0x8] sm:$0xff]
    %v62 = vld [vmem:[#allocation5] sm:$0xff]
    %v63 = vld [vmem:[#allocation5 + $0x8] sm:$0xff]
    %v64 = vld [vmem:[#allocation5 + $0x10] sm:$0xff]
    %v65 = vld [vmem:[#allocation5 + $0x18] sm:$0xff]
    %v66 = vld [vmem:[#allocation5 + $0x20] sm:$0xff]
    %v67 = vld [vmem:[#allocation5 + $0x28] sm:$0xff]
    %v68 = vld [vmem:[#allocation5 + $0x30] sm:$0xff]
    %v69 = vld [vmem:[#allocation5 + $0x38] sm:$0xff]
    %v70 = vld [vmem:[#allocation5 + $0x40] sm:$0xff]
    %v71 = vld [vmem:[#allocation5 + $0x48] sm:$0xff]
    %v72 = vld [vmem:[#allocation5 + $0x50] sm:$0xff]
    %v73 = vld [vmem:[#allocation5 + $0x58] sm:$0xff]
    %v74 = vld [vmem:[#allocation5 + $0x60] sm:$0xff]
    %v75 = vld [vmem:[#allocation5 + $0x68] sm:$0xff]
    %v76 = vld [vmem:[#allocation5 + $0x70] sm:$0xff]
    %v77 = vld [vmem:[#allocation5 + $0x78] sm:$0xff]
    %v78 = vld [vmem:[#allocation5 + $0x80] sm:$0xff]
    %v79 = vld [vmem:[#allocation5 + $0x88] sm:$0xff]
    %v80 = vld [vmem:[#allocation5 + $0x90] sm:$0xff]
    %v81 = vld [vmem:[#allocation5 + $0x98] sm:$0xff]
    %v82 = vld [vmem:[#allocation5 + $0xa0] sm:$0xff]
    %v83 = vld [vmem:[#allocation5 + $0xa8] sm:$0xff]
    %v84 = vld [vmem:[#allocation5 + $0xb0] sm:$0xff]
    %v85 = vld [vmem:[#allocation5 + $0xb8] sm:$0xff]
    %v86 = vld [vmem:[#allocation5 + $0xc0] sm:$0xff]
    %v87 = vld [vmem:[%s2] sm:$0x1]
    %v89 = vlaneseq
    %v90 = vshrl.u32 %v89, 7
    %v91 = vsub.s32 0, %v90
    %v92 = vrot.slane %v87, %v91
    %vm94 = vcmask 588800
    %v96 = vsel %vm94, %v61, 0
    %98 = vmatprep.subr.mxu0 0.0
    %99 = vmatpush1.msra.mxu0 %v62
    %100 = vmatprep.subr.mxu0 0.0
    %101 = vmatpush1.msra.mxu0 %v63
    %102 = vmatprep.subr.mxu0 0.0
    %103 = vmatpush1.msra.mxu0 %v64
    %104 = vmatprep.subr.mxu0 0.0
    %105 = vmatpush1.msra.mxu0 %v65
    %106 = vmatprep.subr.mxu0 0.0
    %107 = vmatpush1.msra.mxu0 %v66
    %108 = vmatprep.subr.mxu0 0.0
    %109 = vmatpush1.msra.mxu0 %v67
    %110 = vmatprep.subr.mxu0 0.0
    %111 = vmatpush1.msra.mxu0 %v68
    %112 = vmatprep.subr.mxu0 0.0
    %113 = vmatpush1.msra.mxu0 %v69
    %114 = vmatprep.subr.mxu0 0.0
    %115 = vmatpush1.msra.mxu0 %v70
    %116 = vmatprep.subr.mxu0 0.0
    %117 = vmatpush1.msra.mxu0 %v71
    %118 = vmatprep.subr.mxu0 0.0
    %119 = vmatpush1.msra.mxu0 %v72
    %120 = vmatprep.subr.mxu0 0.0
    %121 = vmatpush1.msra.mxu0 %v73
    %122 = vmatprep.subr.mxu0 0.0
    %123 = vmatpush1.msra.mxu0 %v74
    %124 = vmatprep.subr.mxu0 0.0
    %125 = vmatpush1.msra.mxu0 %v75
    %126 = vmatprep.subr.mxu0 0.0
    %127 = vmatpush1.msra.mxu0 %v76
    %128 = vmatprep.subr.mxu0 0.0
    %129 = vmatpush1.msra.mxu0 %v77
    %130 = vmatprep.subr.mxu0 0.0
    %131 = vmatpush1.msra.mxu0 %v78
    %132 = vmatprep.subr.mxu0 0.0
    %133 = vmatpush1.msra.mxu0 %v79
    %134 = vmatprep.subr.mxu0 0.0
    %135 = vmatpush1.msra.mxu0 %v80
    %136 = vmatprep.subr.mxu0 0.0
    %137 = vmatpush1.msra.mxu0 %v81
    %138 = vmatprep.subr.mxu0 0.0
    %139 = vmatpush1.msra.mxu0 %v82
    %140 = vmatprep.subr.mxu0 0.0
    %141 = vmatpush1.msra.mxu0 %v83
    %142 = vmatprep.subr.mxu0 0.0
    %143 = vmatpush1.msra.mxu0 %v84
    %144 = vmatprep.subr.mxu0 0.0
    %145 = vmatpush1.msra.mxu0 %v85
    %146 = vmatprep.subr.mxu0 0.0
    %147 = vmatpush1.msra.mxu0 %v86
    %148 = vmatprep.subr.mxu0 0.0
    %149 = vmatpush1.msra.mxu0 0.0
    %150 = vmatprep.subr.mxu0 0.0
    %151 = vmatpush1.msra.mxu0 0.0
    %152 = vmatprep.subr.mxu0 0.0
    %153 = vmatpush1.msra.mxu0 0.0
    %154 = vmatprep.subr.mxu0 0.0
    %155 = vmatpush1.msra.mxu0 0.0
    %156 = vmatprep.subr.mxu0 0.0
    %157 = vmatpush1.msra.mxu0 0.0
    %158 = vmatprep.subr.mxu0 0.0
    %159 = vmatpush1.msra.mxu0 0.0
    %160 = vmatprep.subr.mxu0 0.0
    %161 = vmatpush1.msra.mxu0 0.0
    %162 = vmatprep.mubr.f32.mxu0 %v96
    %163 = vmatmul.mubr.f32.gmra.mrb[0].mxu0 %v60
    %v164 = vpop.f32.mrb[0].mxu0
    %v165 = vadd.f32 %v92, %v164
    %v166 = vpop.f32.mrb[0].mxu0
    %167 = vdwg.mxu0
    %v168 = vmax.f32 %v165, 0.0
    %v169 = vld [vmem:[#allocation7] sm:$0xff]
    %v170 = vld [vmem:[#allocation7 + $0x8] sm:$0xff]
    %v171 = vld [vmem:[#allocation7 + $0x10] sm:$0xff]
    %v172 = vld [vmem:[#allocation7 + $0x18] sm:$0xff]
    %v173 = vld [vmem:[#allocation7 + $0x20] sm:$0xff]
    %v174 = vld [vmem:[#allocation7 + $0x28] sm:$0xff]
    %v175 = vld [vmem:[#allocation7 + $0x30] sm:$0xff]
    %v176 = vld [vmem:[#allocation7 + $0x38] sm:$0xff]
    %v177 = vld [vmem:[#allocation7 + $0x40] sm:$0xff]
    %v178 = vld [vmem:[#allocation7 + $0x48] sm:$0xff]
    %v179 = vld [vmem:[#allocation7 + $0x50] sm:$0xff]
    %v180 = vld [vmem:[#allocation7 + $0x58] sm:$0xff]
    %v181 = vld [vmem:[#allocation7 + $0x60] sm:$0xff]
    %v182 = vld [vmem:[#allocation7 + $0x68] sm:$0xff]
    %v183 = vld [vmem:[#allocation7 + $0x70] sm:$0xff]
    %v184 = vld [vmem:[#allocation7 + $0x78] sm:$0xff]
    %v185 = vld [vmem:[%s4] sm:$0x1]
    %v187 = vlaneseq
    %v188 = vshrl.u32 %v187, 7
    %v189 = vsub.s32 0, %v188
    %v190 = vrot.slane %v185, %v189
    %192 = vmatprep.subr.mxu0 0.0
    %193 = vmatpush1.msra.mxu0 %v169
    %194 = vmatprep.subr.mxu0 0.0
    %195 = vmatpush1.msra.mxu0 %v170
    %196 = vmatprep.subr.mxu0 0.0
    %197 = vmatpush1.msra.mxu0 %v171
    %198 = vmatprep.subr.mxu0 0.0
    %199 = vmatpush1.msra.mxu0 %v172
    %200 = vmatprep.subr.mxu0 0.0
    %201 = vmatpush1.msra.mxu0 %v173
    %202 = vmatprep.subr.mxu0 0.0
    %203 = vmatpush1.msra.mxu0 %v174
    %204 = vmatprep.subr.mxu0 0.0
    %205 = vmatpush1.msra.mxu0 %v175
    %206 = vmatprep.subr.mxu0 0.0
    %207 = vmatpush1.msra.mxu0 %v176
    %208 = vmatprep.subr.mxu0 0.0
    %209 = vmatpush1.msra.mxu0 %v177
    %210 = vmatprep.subr.mxu0 0.0
    %211 = vmatpush1.msra.mxu0 %v178
    %212 = vmatprep.subr.mxu0 0.0
    %213 = vmatpush1.msra.mxu0 %v179
    %214 = vmatprep.subr.mxu0 0.0
    %215 = vmatpush1.msra.mxu0 %v180
    %216 = vmatprep.subr.mxu0 0.0
    %217 = vmatpush1.msra.mxu0 %v181
    %218 = vmatprep.subr.mxu0 0.0
    %219 = vmatpush1.msra.mxu0 %v182
    %220 = vmatprep.subr.mxu0 0.0
    %221 = vmatpush1.msra.mxu0 %v183
    %222 = vmatprep.subr.mxu0 0.0
    %223 = vmatpush1.msra.mxu0 %v184
    %224 = vmatprep.subr.mxu0 0.0
    %225 = vmatpush1.msra.mxu0 0.0
    %226 = vmatprep.subr.mxu0 0.0
    %227 = vmatpush1.msra.mxu0 0.0
    %228 = vmatprep.subr.mxu0 0.0
    %229 = vmatpush1.msra.mxu0 0.0
    %230 = vmatprep.subr.mxu0 0.0
    %231 = vmatpush1.msra.mxu0 0.0
    %232 = vmatprep.subr.mxu0 0.0
    %233 = vmatpush1.msra.mxu0 0.0
    %234 = vmatprep.subr.mxu0 0.0
    %235 = vmatpush1.msra.mxu0 0.0
    %236 = vmatprep.subr.mxu0 0.0
    %237 = vmatpush1.msra.mxu0 0.0
    %238 = vmatprep.subr.mxu0 0.0
    %239 = vmatpush1.msra.mxu0 0.0
    %240 = vmatprep.subr.mxu0 0.0
    %241 = vmatpush1.msra.mxu0 0.0
    %242 = vmatprep.subr.mxu0 0.0
    %243 = vmatpush1.msra.mxu0 0.0
    %244 = vmatprep.subr.mxu0 0.0
    %245 = vmatpush1.msra.mxu0 0.0
    %246 = vmatprep.subr.mxu0 0.0
    %247 = vmatpush1.msra.mxu0 0.0
    %248 = vmatprep.subr.mxu0 0.0
    %249 = vmatpush1.msra.mxu0 0.0
    %250 = vmatprep.subr.mxu0 0.0
    %251 = vmatpush1.msra.mxu0 0.0
    %252 = vmatprep.subr.mxu0 0.0
    %253 = vmatpush1.msra.mxu0 0.0
    %254 = vmatprep.subr.mxu0 0.0
    %255 = vmatpush1.msra.mxu0 0.0
    %256 = vmatprep.mubr.f32.mxu0 0.0
    %257 = vmatmul.mubr.f32.gmra.mrb[0].mxu0 %v168
    %v258 = vpop.f32.mrb[0].mxu0
    %v259 = vadd.f32 %v190, %v258
    %v260 = vpop.f32.mrb[0].mxu0
    %261 = vdwg.mxu0
    %262 = vst [vmem:[#allocation8] sm:$0xff] %v259
    // Predicated region
    $region34: #{tpu_custom_call.1} parent=1 // pred_check
      _
    $region35: #{tpu_custom_call.1} parent=1 // pred_check_branch
      %264 = sbr.rel (0) target = $region37
    $region36: #{tpu_custom_call.1} parent=1 // pred_region
      %s266 = ssub.s32 128, 128
      %267 = vsyncadd [#allocation4], %s266
      %s269 = sshll.u32 [#allocation8], 4
      %s270 = int_to_ptr.vmem [resolvable:$true] %s269
      %272 = dma.vmem_to_hbm [thread:$0]  %s270, 128, %s5, [#allocation4]
    $region37: #{tpu_custom_call.1} parent=1 // pred_fallthru
      _
    // Predicated region
    $region38: #{tpu_custom_call.1} parent=1 // pred_check
      _
    $region39: #{tpu_custom_call.1} parent=1 // pred_check_branch
      %274 = sbr.rel (0) target = $region41
    $region40: #{tpu_custom_call.1} parent=1 // pred_region
      %275 = dma.done [#allocation4], 128
    $region41: #{tpu_custom_call.1} parent=1 // pred_fallthru
      _
    %276 = vsyncpa [#allocation3], 1
    %277 = vsyncpa [#allocation6], 1
    %278 = vsyncpa [#allocation4], 1

</llo_original>
